<compile_context>
chip_gen: v7x
topology: tpu7x:2x2x1
jax: 0.10.0
libtpu: 0.0.40
codegen_flags: <defaults>
</compile_context>

<pallas_src>
import functools

import jax
import jax.numpy as jnp
from jax.experimental import pallas as pl
from jax.experimental.pallas import tpu as pltpu

_HAS_BUFFERED = hasattr(pl, "Buffered")


def _alpha_kernel(e_ref, wp_ref, bp_ref, wh_ref, bh_ref, out_ref,
                  *, n_chunks, chunk, mxu_dtype):
    # e tile arrives in f32 (no wrapper-side cast pass); cast here if bf16
    # MXU streaming was requested -- the VPU cast hides under DMA/matmul.
    e = e_ref[...]
    if mxu_dtype is not None:
        e = e.astype(mxu_dtype)

    bn = e.shape[0]
    y = jnp.zeros((bn, 2), jnp.float32)
    # Chunk the projection's output (N) dim so the f32 h intermediate stays
    # small (bn*chunk*4 bytes); each chunk's head contribution is fused in.
    for c in range(n_chunks):
        lo = c * chunk
        hi = lo + chunk
        # ---- proj chunk: Linear(D, chunk) + LeakyReLU(0.01) ----
        h = jnp.dot(e, wp_ref[:, lo:hi], preferred_element_type=jnp.float32)
        h = h + bp_ref[:, lo:hi]                                # [1,chunk] bcast
        h = jnp.where(h > 0, h, jnp.float32(0.01) * h)          # LeakyReLU
        if mxu_dtype is not None:
            h = h.astype(mxu_dtype)                             # bf16 MXU path
        # ---- fused heads partial: [mu | sigma_pre] += h @ wh[chunk] ----
        y = y + jnp.dot(h, wh_ref[lo:hi, :], preferred_element_type=jnp.float32)
    y = y + bh_ref[...]                                         # [1, 2] bcast

    # Softplus only on the sigma column (col 1).
    # PyTorch Softplus (beta=1, threshold=20): x if x > 20 else log1p(exp(x)).
    # Computed on both columns then selected -- the extra exp/log1p is
    # free-slot EUP work. The min(., 20) clamp also keeps the garbage rows of
    # a padded partial last block finite (Pallas drops their writeback); do
    # not remove the clamp without re-checking that path.
    sp = jnp.log1p(jnp.exp(jnp.minimum(y, jnp.float32(20.0))))
    sp = jnp.where(y > jnp.float32(20.0), y, sp)
    col = jax.lax.broadcasted_iota(jnp.int32, y.shape, 1)
    out_ref[...] = jnp.where(col == 1, sp, y).astype(out_ref.dtype)


def _round_up(x, m):
    return ((x + m - 1) // m) * m


def _cdiv(a, b):
    return (a + b - 1) // b


def _vmem_plan():
    """Generation-aware (budget, vmem_limit_bytes).

    v5e/v6e: 128 MiB physical VMEM (16 / 32 MiB default scoped limit) -> use
    a 64 MiB footprint budget and raise the scoped limit to match.
    v7x: 64 MiB physical -> ~24 MiB budget (weights/h compete with the tile).
    """
    try:
        cap = int(pltpu.get_tpu_info().vmem_capacity_bytes)
    except Exception:  # non-TPU tracing / older API: be conservative (v7x-sized)
        cap = 64 * 1024 * 1024
    if cap >= 100 * 1024 * 1024:   # v5e / v6e class (128 MiB)
        budget = 64 * 1024 * 1024
    else:                          # v7x class (64 MiB)
        budget = 24 * 1024 * 1024
    limit = min(cap, budget + 16 * 1024 * 1024)
    return budget, limit


def _choose_chunk(D):
    """Chunk size for the proj output (N) dim inside the kernel."""
    if D > 512 and D % 512 == 0:
        return 512, D // 512
    return D, 1


def _choose_block_ns(Ns, D, block_ns, budget, w_item, chunk, mult):
    """Pick a row tile: MiB-scale (amortize per-step overhead), VMEM-safe,
    and giving >= 2 parallel grid steps only when each half is big enough."""
    padded = _round_up(Ns, mult)
    if block_ns is None:
        # Target ~2 MiB of f32 e per grid step (measured: tiny tiles reach
        # ~29% of HBM roofline, MiB-scale tiles ~85%).
        target = max(256, (2 * 1024 * 1024) // max(1, D * 4))
        bn = min(_round_up(target, mult), padded)
    else:
        bn = min(_round_up(block_ns, mult), padded)
    # Only split when each half still has >= ~256 rows: the split feeds v7x's
    # two TensorCores; on single-TC v5e/v6e the grid is serial, so splitting a
    # tiny problem just adds ~0.35 us/step + an extra output DMA.
    if padded >= 512 and _cdiv(padded, bn) < 2:
        bn = max(mult, _round_up(_cdiv(padded, 2), mult))

    weight_bufs = 1 if _HAS_BUFFERED else 2   # Buffered(1) => single buffer
    def footprint(b):
        e_tile = 2 * b * D * 4                              # double-buffered f32 e tile
        e_cast = b * D * w_item if w_item == 2 else 0       # in-kernel bf16 copy
        h_mid = b * chunk * 4 + (b * chunk * 2 if w_item == 2 else 0)
        out_t = 3 * b * 2 * 4                               # y acc + 2 out buffers
        wts = weight_bufs * (D * D * w_item + D * 4 + D * 2 * w_item + 2 * 4)
        return e_tile + e_cast + h_mid + out_t + wts

    while bn > mult and footprint(bn) > budget:
        bn = max(mult, _round_up(bn // 2, mult))
    return bn


def _const_spec(shape):
    """BlockSpec for a grid-invariant (resident) operand; single-buffered."""
    idx = lambda i: tuple(0 for _ in shape)
    if _HAS_BUFFERED:
        try:
            return pl.BlockSpec(shape, idx, pipeline_mode=pl.Buffered(1))
        except TypeError:
            pass
    return pl.BlockSpec(shape, idx)


@functools.partial(jax.jit, static_argnames=("block_ns", "mxu_bf16"))
def factor_decoder_alpha_layer(e, w_proj, b_proj, w_mu, b_mu, w_sigma, b_sigma,
                               block_ns=None, mxu_bf16=False):
    """mu, sigma = AlphaLayer(e).  mxu_bf16=True streams the matmul operands
    in bf16 (f32 accumulation) -- opt-in, since it changes numerics vs. the
    f32 PyTorch module."""
    Ns, D = e.shape
    mxu_dtype = jnp.bfloat16 if mxu_bf16 else None
    w_item = 2 if mxu_bf16 else 4
    mult = 16 if mxu_bf16 else 8        # sublane multiple of the MXU-operand dtype

    budget, vmem_limit = _vmem_plan()
    chunk, n_chunks = _choose_chunk(D)
    bn = _choose_block_ns(Ns, D, block_ns, budget, w_item, chunk, mult)
    grid = (pl.cdiv(Ns, bn),)

    # Fuse the two 1-wide heads into a single [D, 2] weight / [1, 2] bias.
    w_heads = jnp.concatenate([w_mu, w_sigma], axis=1)
    b_heads = jnp.concatenate([b_mu, b_sigma], axis=1).astype(jnp.float32)
    # Weights are small & resident: casting them wrapper-side is negligible
    # and halves their VMEM footprint in bf16 mode. e stays f32 (cast in-kernel).
    wdt = mxu_dtype if mxu_dtype is not None else jnp.float32
    w_proj_in = w_proj.astype(wdt)
    w_heads = w_heads.astype(wdt)

    kernel = functools.partial(_alpha_kernel, n_chunks=n_chunks, chunk=chunk,
                               mxu_dtype=mxu_dtype)

    out = pl.pallas_call(
        kernel,
        out_shape=jax.ShapeDtypeStruct((Ns, 2), jnp.float32),
        grid_spec=pltpu.PrefetchScalarGridSpec(
            num_scalar_prefetch=0,
            grid=grid,
            in_specs=[
                pl.BlockSpec((bn, D), lambda i: (i, 0)),   # e row tile (streamed, f32)
                _const_spec((D, D)),                       # W_proj (resident)
                _const_spec((1, D)),                       # b_proj
                _const_spec((D, 2)),                       # fused head weights
                _const_spec((1, 2)),                       # fused head bias
            ],
            out_specs=pl.BlockSpec((bn, 2), lambda i: (i, 0)),
        ),
        compiler_params=pltpu.CompilerParams(
            dimension_semantics=("parallel",),
            vmem_limit_bytes=int(vmem_limit)),
    )(e.astype(jnp.float32), w_proj_in, b_proj.astype(jnp.float32),
      w_heads, b_heads)

    return out[:, 0:1], out[:, 1:2]


def _reference(e, w_proj, b_proj, w_mu, b_mu, w_sigma, b_sigma,
               mxu_dtype=None):
    """Pure-JAX reference. If mxu_dtype is given, mimic the kernel's
    reduced-precision matmul operands (f32 accumulation)."""
    if mxu_dtype is not None:
        h = jnp.dot(e.astype(mxu_dtype), w_proj.astype(mxu_dtype),
                    preferred_element_type=jnp.float32) + b_proj
    else:
        h = e @ w_proj + b_proj
    h = jnp.where(h > 0, h, 0.01 * h)
    if mxu_dtype is not None:
        hh = h.astype(mxu_dtype)
        mu = jnp.dot(hh, w_mu.astype(mxu_dtype),
                     preferred_element_type=jnp.float32) + b_mu
        s = jnp.dot(hh, w_sigma.astype(mxu_dtype),
                    preferred_element_type=jnp.float32) + b_sigma
    else:
        mu = h @ w_mu + b_mu
        s = h @ w_sigma + b_sigma
    sigma = jnp.where(s > 20.0, s, jnp.log1p(jnp.exp(jnp.minimum(s, 20.0))))
    return mu, sigma


def _make_params(key, Ns, D):
    k = jax.random.split(key, 8)
    bound = 1.0 / (D ** 0.5)
    e = jax.random.normal(k[0], (Ns, D), dtype=jnp.float32)
    w_proj = jax.random.uniform(k[1], (D, D), jnp.float32, -bound, bound)
    b_proj = jax.random.uniform(k[2], (1, D), jnp.float32, -bound, bound)
    w_mu = jax.random.uniform(k[3], (D, 1), jnp.float32, -bound, bound)
    b_mu = jax.random.uniform(k[4], (1, 1), jnp.float32, -bound, bound)
    w_sigma = jax.random.uniform(k[5], (D, 1), jnp.float32, -bound, bound)
    b_sigma = jax.random.uniform(k[6], (1, 1), jnp.float32, -bound, bound)
    return e, w_proj, b_proj, w_mu, b_mu, w_sigma, b_sigma


def _run_case(key, Ns, D, mxu_bf16=False):
    params = _make_params(key, Ns, D)
    mu, sigma = factor_decoder_alpha_layer(*params, mxu_bf16=mxu_bf16)
    jax.block_until_ready((mu, sigma))
    assert mu.shape == (Ns, 1) and sigma.shape == (Ns, 1)

    if mxu_bf16:
        # Same-precision (bf16-operand) reference: tight-ish check.
        mu_r, sg_r = _reference(*params, mxu_dtype=jnp.bfloat16)
        assert jnp.allclose(mu, mu_r, atol=2e-3, rtol=2e-3)
        assert jnp.allclose(sigma, sg_r, atol=2e-3, rtol=2e-3)
        # Full-f32 reference: semantic check with bf16-stream tolerance.
        mu_f, sg_f = _reference(*params)
        assert jnp.allclose(mu, mu_f, atol=5e-2, rtol=5e-2)
        assert jnp.allclose(sigma, sg_f, atol=5e-2, rtol=5e-2)
    else:
        mu_f, sg_f = _reference(*params)
        assert jnp.allclose(mu, mu_f, atol=2e-3, rtol=2e-3)
        assert jnp.allclose(sigma, sg_f, atol=2e-3, rtol=2e-3)


if __name__ == "__main__":
    key = jax.random.PRNGKey(0)
    k1, k2, k3 = jax.random.split(key, 3)
    # Small shapes consistent with the module: Ns stocks, embedding_dim D.
    _run_case(k1, Ns=8, D=32)                    # single resident block, f32 path
    _run_case(k2, Ns=20, D=32)                   # partial (masked) block, f32 path
    _run_case(k3, Ns=640, D=32, mxu_bf16=True)   # 2-step grid, bf16 MXU streaming
    print("KERNEL_OK")
</pallas_src>

<mosaic_0001>
module attributes {stable_mosaic.version = 11 : i64} {
  func.func @_alpha_kernel(%arg0: i32, %arg1: memref<8x32xf32, #tpu.memory_space<vmem>>, %arg2: memref<32x32xf32, #tpu.memory_space<vmem>>, %arg3: memref<1x32xf32, #tpu.memory_space<vmem>>, %arg4: memref<32x2xf32, #tpu.memory_space<vmem>>, %arg5: memref<1x2xf32, #tpu.memory_space<vmem>>, %arg6: memref<8x2xf32, #tpu.memory_space<vmem>>) attributes {dimension_semantics = [#tpu.dimension_semantics<parallel>], iteration_bounds = array<i64: 1>, scalar_prefetch = 0 : i64, scratch_operands = 0 : i64, tpu.core_type = #tpu.core_type<tc>, window_params = [{transform_indices = @transform_0, window_bounds = array<i64: 8, 32>}, {pipeline_mode = #tpu.pipeline_mode<synchronous>, transform_indices = @transform_1, window_bounds = array<i64: 32, 32>}, {pipeline_mode = #tpu.pipeline_mode<synchronous>, transform_indices = @transform_2, window_bounds = array<i64: 1, 32>}, {pipeline_mode = #tpu.pipeline_mode<synchronous>, transform_indices = @transform_3, window_bounds = array<i64: 32, 2>}, {pipeline_mode = #tpu.pipeline_mode<synchronous>, transform_indices = @transform_4, window_bounds = array<i64: 1, 2>}, {transform_indices = @transform_5, window_bounds = array<i64: 8, 2>}]} {
    %c0 = arith.constant 0 : index
    %c0_0 = arith.constant 0 : index
    %0 = vector.load %arg1[%c0, %c0_0] : memref<8x32xf32, #tpu.memory_space<vmem>>, vector<8x32xf32>
    %cst = arith.constant 0.000000e+00 : f32
    %1 = vector.broadcast %cst : f32 to vector<8x2xf32>
    %c0_1 = arith.constant 0 : index
    %c0_2 = arith.constant 0 : index
    %2 = vector.load %arg2[%c0_1, %c0_2] : memref<32x32xf32, #tpu.memory_space<vmem>>, vector<32x32xf32>
    %cst_3 = arith.constant dense<0.000000e+00> : vector<8x32xf32>
    %3 = tpu.matmul %0, %2, %cst_3 {dimension_numbers = #tpu.dot_dimension_numbers<[1], [0], [0], [1], [0, 0, 1, 1], [], []>} : vector<8x32xf32>, vector<32x32xf32>, vector<8x32xf32> -> vector<8x32xf32>
    %c0_4 = arith.constant 0 : index
    %c0_5 = arith.constant 0 : index
    %4 = vector.load %arg3[%c0_4, %c0_5] : memref<1x32xf32, #tpu.memory_space<vmem>>, vector<1x32xf32>
    %5 = vector.broadcast %4 : vector<1x32xf32> to vector<8x32xf32>
    %6 = arith.addf %3, %5 : vector<8x32xf32>
    %cst_6 = arith.constant 0.000000e+00 : f32
    %7 = vector.broadcast %cst_6 : f32 to vector<8x32xf32>
    %8 = arith.cmpf ogt, %6, %7 : vector<8x32xf32>
    %cst_7 = arith.constant 0.00999999977 : f32
    %9 = vector.broadcast %cst_7 : f32 to vector<8x32xf32>
    %10 = arith.mulf %9, %6 : vector<8x32xf32>
    %11 = arith.select %8, %6, %10 : vector<8x32xi1>, vector<8x32xf32>
    %c0_8 = arith.constant 0 : index
    %c0_9 = arith.constant 0 : index
    %12 = vector.load %arg4[%c0_8, %c0_9] : memref<32x2xf32, #tpu.memory_space<vmem>>, vector<32x2xf32>
    %cst_10 = arith.constant dense<0.000000e+00> : vector<8x2xf32>
    %13 = tpu.matmul %11, %12, %cst_10 {dimension_numbers = #tpu.dot_dimension_numbers<[1], [0], [0], [1], [0, 0, 1, 1], [], []>} : vector<8x32xf32>, vector<32x2xf32>, vector<8x2xf32> -> vector<8x2xf32>
    %14 = arith.addf %1, %13 : vector<8x2xf32>
    %c0_11 = arith.constant 0 : index
    %c0_12 = arith.constant 0 : index
    %15 = vector.load %arg5[%c0_11, %c0_12] : memref<1x2xf32, #tpu.memory_space<vmem>>, vector<1x2xf32>
    %16 = vector.broadcast %15 : vector<1x2xf32> to vector<8x2xf32>
    %17 = arith.addf %14, %16 : vector<8x2xf32>
    %cst_13 = arith.constant 2.000000e+01 : f32
    %18 = vector.broadcast %cst_13 : f32 to vector<8x2xf32>
    %19 = arith.minimumf %17, %18 : vector<8x2xf32>
    %20 = math.exp %19 : vector<8x2xf32>
    %21 = math.log1p %20 : vector<8x2xf32>
    %cst_14 = arith.constant 2.000000e+01 : f32
    %22 = vector.broadcast %cst_14 : f32 to vector<8x2xf32>
    %23 = arith.cmpf ogt, %17, %22 : vector<8x2xf32>
    %24 = arith.select %23, %17, %21 : vector<8x2xi1>, vector<8x2xf32>
    %25 = tpu.iota {dimensions = array<i32: 1>} : vector<8x2xi32>
    %c1_i32 = arith.constant 1 : i32
    %26 = vector.broadcast %c1_i32 : i32 to vector<8x2xi32>
    %27 = arith.cmpi eq, %25, %26 : vector<8x2xi32>
    %28 = arith.select %27, %24, %17 : vector<8x2xi1>, vector<8x2xf32>
    %c0_15 = arith.constant 0 : index
    %c0_16 = arith.constant 0 : index
    %29 = vector.load %arg6[%c0_15, %c0_16] : memref<8x2xf32, #tpu.memory_space<vmem>>, vector<8x2xf32>
    tpu.vector_store %arg6[%c0_15, %c0_16], %28 {strides = array<i32>} : memref<8x2xf32, #tpu.memory_space<vmem>>, vector<8x2xf32>,
    return
  }
  func.func @transform_0(%arg0: i32) -> (i32, i32) {
    %c0_i32 = arith.constant 0 : i32
    %c0_i32_0 = arith.constant 0 : i32
    return %arg0, %c0_i32 : i32, i32
  }
  func.func @transform_1(%arg0: i32) -> (i32, i32) {
    %c0_i32 = arith.constant 0 : i32
    %c0_i32_0 = arith.constant 0 : i32
    %c0_i32_1 = arith.constant 0 : i32
    return %c0_i32, %c0_i32_0 : i32, i32
  }
  func.func @transform_2(%arg0: i32) -> (i32, i32) {
    %c0_i32 = arith.constant 0 : i32
    %c0_i32_0 = arith.constant 0 : i32
    %c0_i32_1 = arith.constant 0 : i32
    return %c0_i32, %c0_i32_0 : i32, i32
  }
  func.func @transform_3(%arg0: i32) -> (i32, i32) {
    %c0_i32 = arith.constant 0 : i32
    %c0_i32_0 = arith.constant 0 : i32
    %c0_i32_1 = arith.constant 0 : i32
    return %c0_i32, %c0_i32_0 : i32, i32
  }
  func.func @transform_4(%arg0: i32) -> (i32, i32) {
    %c0_i32 = arith.constant 0 : i32
    %c0_i32_0 = arith.constant 0 : i32
    %c0_i32_1 = arith.constant 0 : i32
    return %c0_i32, %c0_i32_0 : i32, i32
  }
  func.func @transform_5(%arg0: i32) -> (i32, i32) {
    %c0_i32 = arith.constant 0 : i32
    %c0_i32_0 = arith.constant 0 : i32
    return %arg0, %c0_i32 : i32, i32
  }
}

</mosaic_0001>

<llo_original>
// kernel: factor_decoder_alpha_layer.1
$region0: #{factor_decoder_alpha_layer.1}
  #allocation0 [shape = 'u32[]', space=smem, size = 0x4, offset = 0x4, fixed_abs, tag = 'smem constant byte address 0x4 - core index']
  #allocation1 [shape = 'u32[144,128]{1,0:T(1,128)}', space=vmem, size = 0x12000, scoped, tag = 'internal scratch']
  %s0 = inlined_call_operand.vmem [shape: f32[8,32], index: 0, kind: input, shape index: {}]
  %s1 = inlined_call_operand.vmem [shape: f32[32,32], index: 1, kind: input, shape index: {}]
  %s2 = inlined_call_operand.vmem [shape: f32[1,32], index: 2, kind: input, shape index: {}]
  %s3 = inlined_call_operand.vmem [shape: f32[32,2], index: 3, kind: input, shape index: {}]
  %s4 = inlined_call_operand.vmem [shape: f32[1,2], index: 4, kind: input, shape index: {}]
  %s5 = inlined_call_operand.vmem [shape: f32[8,2], index: 5, kind: output, shape index: {}]
  %s6 = sld [smem:[#allocation0]]
  $region30: #{factor_decoder_alpha_layer.1} parent=0
    _
  %s8 = ssub.s32 1, %s6
  %s9 = scalar_select 0, %s8, %s6
  // Predicated region
  $region2: #{factor_decoder_alpha_layer.1} parent=0 // pred_check
    _
  $region3: #{factor_decoder_alpha_layer.1} parent=0 // pred_check_branch
    %11 = sbr.rel (0) target = $region5
  $region4: #{factor_decoder_alpha_layer.1} parent=0 // pred_region
    _
  $region5: #{factor_decoder_alpha_layer.1} parent=0 // pred_fallthru
    _
  // Predicated region
  $region6: #{factor_decoder_alpha_layer.1} parent=0 // pred_check
    _
  $region7: #{factor_decoder_alpha_layer.1} parent=0 // pred_check_branch
    %13 = sbr.rel (0) target = $region9
  $region8: #{factor_decoder_alpha_layer.1} parent=0 // pred_region
    _
  $region9: #{factor_decoder_alpha_layer.1} parent=0 // pred_fallthru
    _
  // Predicated region
  $region10: #{factor_decoder_alpha_layer.1} parent=0 // pred_check
    _
  $region11: #{factor_decoder_alpha_layer.1} parent=0 // pred_check_branch
    %15 = sbr.rel (0) target = $region13
  $region12: #{factor_decoder_alpha_layer.1} parent=0 // pred_region
    _
  $region13: #{factor_decoder_alpha_layer.1} parent=0 // pred_fallthru
    _
  // Predicated region
  $region14: #{factor_decoder_alpha_layer.1} parent=0 // pred_check
    _
  $region15: #{factor_decoder_alpha_layer.1} parent=0 // pred_check_branch
    %17 = sbr.rel (0) target = $region17
  $region16: #{factor_decoder_alpha_layer.1} parent=0 // pred_region
    _
  $region17: #{factor_decoder_alpha_layer.1} parent=0 // pred_fallthru
    _
  // Predicated region
  $region18: #{factor_decoder_alpha_layer.1} parent=0 // pred_check
    _
  $region19: #{factor_decoder_alpha_layer.1} parent=0 // pred_check_branch
    %19 = sbr.rel (0) target = $region21
  $region20: #{factor_decoder_alpha_layer.1} parent=0 // pred_region
    _
  $region21: #{factor_decoder_alpha_layer.1} parent=0 // pred_fallthru
    _
  %v20 = vld [vmem:[%s0] sm:$0xff]
  %v21 = vld [vmem:[%s1] sm:$0xff]
  %v22 = vld [vmem:[%s1 + $0x8] sm:$0xff]
  %v23 = vld [vmem:[%s1 + $0x10] sm:$0xff]
  %v24 = vld [vmem:[%s1 + $0x18] sm:$0xff]
  %v25 = vld [vmem:[%s2] sm:$0x1]
  %v27 = vlaneseq
  %v28 = vshrl.u32 %v27, 7
  %v29 = vsub.s32 0, %v28
  %v30 = vrot.slane %v25, %v29
  %vm32 = vcmask 261120
  %v34 = vsel %vm32, %v20, 0
  %36 = vmatprep.subr.mxu0 0.0
  %37 = vmatpush1.msra.mxu0 %v21
  %38 = vmatprep.subr.mxu0 0.0
  %39 = vmatpush1.msra.mxu0 %v22
  %40 = vmatprep.subr.mxu0 0.0
  %41 = vmatpush1.msra.mxu0 %v23
  %42 = vmatprep.subr.mxu0 0.0
  %43 = vmatpush1.msra.mxu0 %v24
  %44 = vmatprep.subr.mxu0 0.0
  %45 = vmatpush1.msra.mxu0 0.0
  %46 = vmatprep.subr.mxu0 0.0
  %47 = vmatpush1.msra.mxu0 0.0
  %48 = vmatprep.subr.mxu0 0.0
  %49 = vmatpush1.msra.mxu0 0.0
  %50 = vmatprep.subr.mxu0 0.0
  %51 = vmatpush1.msra.mxu0 0.0
  %52 = vmatprep.subr.mxu0 0.0
  %53 = vmatpush1.msra.mxu0 0.0
  %54 = vmatprep.subr.mxu0 0.0
  %55 = vmatpush1.msra.mxu0 0.0
  %56 = vmatprep.subr.mxu0 0.0
  %57 = vmatpush1.msra.mxu0 0.0
  %58 = vmatprep.subr.mxu0 0.0
  %59 = vmatpush1.msra.mxu0 0.0
  %60 = vmatprep.subr.mxu0 0.0
  %61 = vmatpush1.msra.mxu0 0.0
  %62 = vmatprep.subr.mxu0 0.0
  %63 = vmatpush1.msra.mxu0 0.0
  %64 = vmatprep.subr.mxu0 0.0
  %65 = vmatpush1.msra.mxu0 0.0
  %66 = vmatprep.subr.mxu0 0.0
  %67 = vmatpush1.msra.mxu0 0.0
  %68 = vmatprep.subr.mxu0 0.0
  %69 = vmatpush1.msra.mxu0 0.0
  %70 = vmatprep.subr.mxu0 0.0
  %71 = vmatpush1.msra.mxu0 0.0
  %72 = vmatprep.subr.mxu0 0.0
  %73 = vmatpush1.msra.mxu0 0.0
  %74 = vmatprep.subr.mxu0 0.0
  %75 = vmatpush1.msra.mxu0 0.0
  %76 = vmatprep.subr.mxu0 0.0
  %77 = vmatpush1.msra.mxu0 0.0
  %78 = vmatprep.subr.mxu0 0.0
  %79 = vmatpush1.msra.mxu0 0.0
  %80 = vmatprep.subr.mxu0 0.0
  %81 = vmatpush1.msra.mxu0 0.0
  %82 = vmatprep.subr.mxu0 0.0
  %83 = vmatpush1.msra.mxu0 0.0
  %84 = vmatprep.subr.mxu0 0.0
  %85 = vmatpush1.msra.mxu0 0.0
  %86 = vmatprep.subr.mxu0 0.0
  %87 = vmatpush1.msra.mxu0 0.0
  %88 = vmatprep.subr.mxu0 0.0
  %89 = vmatpush1.msra.mxu0 0.0
  %90 = vmatprep.subr.mxu0 0.0
  %91 = vmatpush1.msra.mxu0 0.0
  %92 = vmatprep.subr.mxu0 0.0
  %93 = vmatpush1.msra.mxu0 0.0
  %94 = vmatprep.subr.mxu0 0.0
  %95 = vmatpush1.msra.mxu0 0.0
  %96 = vmatprep.subr.mxu0 0.0
  %97 = vmatpush1.msra.mxu0 0.0
  %98 = vmatprep.subr.mxu0 0.0
  %99 = vmatpush1.msra.mxu0 0.0
  %100 = vmatprep.mubr.f32.mxu0 0.0
  %101 = vmatmul.mubr.f32.gmra.mrb[0].mxu0 %v34
  %v102 = vpop.f32.mrb[0].mxu0
  %v103 = vadd.f32 %v30, %v102
  %v104 = vpop.f32.mrb[0].mxu0
  %105 = vdwg.mxu0
  %vm106 = vcmp.gt.f32.partialorder %v103, 0.0
  %v107 = vmul.f32 %v103, 0.01
  %v108 = vsel %vm106, %v103, %v107
  %v109 = vld [vmem:[%s3] sm:$0xff]
  %v110 = vld [vmem:[%s3 + $0x8] sm:$0xff]
  %v111 = vld [vmem:[%s3 + $0x10] sm:$0xff]
  %v112 = vld [vmem:[%s3 + $0x18] sm:$0xff]
  %v113 = vld [vmem:[%s4] sm:$0x1]
  %v115 = vlaneseq
  %v116 = vshrl.u32 %v115, 7
  %v117 = vsub.s32 0, %v116
  %v118 = vrot.slane %v113, %v117
  %v121 = vsel %vm32, %v108, 0
  %123 = vmatprep.subr.mxu0 0.0
  %124 = vmatpush1.msra.mxu0 %v109
  %125 = vmatprep.subr.mxu0 0.0
  %126 = vmatpush1.msra.mxu0 %v110
  %127 = vmatprep.subr.mxu0 0.0
  %128 = vmatpush1.msra.mxu0 %v111
  %129 = vmatprep.subr.mxu0 0.0
  %130 = vmatpush1.msra.mxu0 %v112
  %131 = vmatprep.subr.mxu0 0.0
  %132 = vmatpush1.msra.mxu0 0.0
  %133 = vmatprep.subr.mxu0 0.0
  %134 = vmatpush1.msra.mxu0 0.0
  %135 = vmatprep.subr.mxu0 0.0
  %136 = vmatpush1.msra.mxu0 0.0
  %137 = vmatprep.subr.mxu0 0.0
  %138 = vmatpush1.msra.mxu0 0.0
  %139 = vmatprep.subr.mxu0 0.0
  %140 = vmatpush1.msra.mxu0 0.0
  %141 = vmatprep.subr.mxu0 0.0
  %142 = vmatpush1.msra.mxu0 0.0
  %143 = vmatprep.subr.mxu0 0.0
  %144 = vmatpush1.msra.mxu0 0.0
  %145 = vmatprep.subr.mxu0 0.0
  %146 = vmatpush1.msra.mxu0 0.0
  %147 = vmatprep.subr.mxu0 0.0
  %148 = vmatpush1.msra.mxu0 0.0
  %149 = vmatprep.subr.mxu0 0.0
  %150 = vmatpush1.msra.mxu0 0.0
  %151 = vmatprep.subr.mxu0 0.0
  %152 = vmatpush1.msra.mxu0 0.0
  %153 = vmatprep.subr.mxu0 0.0
  %154 = vmatpush1.msra.mxu0 0.0
  %155 = vmatprep.subr.mxu0 0.0
  %156 = vmatpush1.msra.mxu0 0.0
  %157 = vmatprep.subr.mxu0 0.0
  %158 = vmatpush1.msra.mxu0 0.0
  %159 = vmatprep.subr.mxu0 0.0
  %160 = vmatpush1.msra.mxu0 0.0
  %161 = vmatprep.subr.mxu0 0.0
  %162 = vmatpush1.msra.mxu0 0.0
  %163 = vmatprep.subr.mxu0 0.0
  %164 = vmatpush1.msra.mxu0 0.0
  %165 = vmatprep.subr.mxu0 0.0
  %166 = vmatpush1.msra.mxu0 0.0
  %167 = vmatprep.subr.mxu0 0.0
  %168 = vmatpush1.msra.mxu0 0.0
  %169 = vmatprep.subr.mxu0 0.0
  %170 = vmatpush1.msra.mxu0 0.0
  %171 = vmatprep.subr.mxu0 0.0
  %172 = vmatpush1.msra.mxu0 0.0
  %173 = vmatprep.subr.mxu0 0.0
  %174 = vmatpush1.msra.mxu0 0.0
  %175 = vmatprep.subr.mxu0 0.0
  %176 = vmatpush1.msra.mxu0 0.0
  %177 = vmatprep.subr.mxu0 0.0
  %178 = vmatpush1.msra.mxu0 0.0
  %179 = vmatprep.subr.mxu0 0.0
  %180 = vmatpush1.msra.mxu0 0.0
  %181 = vmatprep.subr.mxu0 0.0
  %182 = vmatpush1.msra.mxu0 0.0
  %183 = vmatprep.subr.mxu0 0.0
  %184 = vmatpush1.msra.mxu0 0.0
  %185 = vmatprep.subr.mxu0 0.0
  %186 = vmatpush1.msra.mxu0 0.0
  %187 = vmatprep.mubr.f32.mxu0 0.0
  %188 = vmatmul.mubr.f32.gmra.mrb[0].mxu0 %v121
  %v189 = vpop.f32.mrb[0].mxu0
  %v190 = vadd.f32 %v118, %v189
  %v191 = vpop.f32.mrb[0].mxu0
  %192 = vdwg.mxu0
  %v193 = vmin.f32 %v190, 20.0
  %v194 = vmul.f32 %v193, 1.442695
  %v195 = vpow.pop %v194
  %v196 = vadd.f32 %v195, 1.0
  %v197 = vlog2.pop %v196
  %v198 = vmul.f32 %v197, 0.6931472
  %v199 = vmul.f32 -0.5, %v195
  %v200 = vadd.f32 %v199, 1.0
  %v201 = vmul.f32 %v200, %v195
  %v202 = vand.u32 2147483647, %v195
  %vm203 = vcmp.lt.f32.partialorder %v202, 0.0004427343
  %v204 = vsel %vm203, %v201, %v198
  %vm205 = vcmp.gt.f32.partialorder %v190, 20.0
  %v206 = vsel %vm205, %v190, %v204
  %v207 = vlaneseq
  %v208 = vand.u32 %v207, 127
  %vm209 = vcmp.eq.s32.totalorder %v208, 1
  %v210 = vsel %vm209, %v206, %v190
  %vm211 = vcmask 15360
  %212 = vst.msk [vmem:[%s5] sm:$0xff] %vm211, %v210
  // Predicated region
  $region22: #{factor_decoder_alpha_layer.1} parent=0 // pred_check
    _
  $region23: #{factor_decoder_alpha_layer.1} parent=0 // pred_check_branch
    %214 = sbr.rel (0) target = $region25
  $region24: #{factor_decoder_alpha_layer.1} parent=0 // pred_region
    _
  $region25: #{factor_decoder_alpha_layer.1} parent=0 // pred_fallthru
    _
  // Predicated region
  $region26: #{factor_decoder_alpha_layer.1} parent=0 // pred_check
    _
  $region27: #{factor_decoder_alpha_layer.1} parent=0 // pred_check_branch
    %216 = sbr.rel (0) target = $region29
  $region28: #{factor_decoder_alpha_layer.1} parent=0 // pred_region
    _
  $region29: #{factor_decoder_alpha_layer.1} parent=0 // pred_fallthru
    _

</llo_original>
